<compile_context>
chip_gen: v7x
topology: tpu7x:2x2x1
jax: 0.10.0
libtpu: 0.0.40
codegen_flags: <defaults>
</compile_context>

<pallas_src>
import jax
import jax.numpy as jnp
from jax import lax
from jax.experimental import pallas as pl
from jax.experimental.pallas import tpu as pltpu

# Problem shape.
B, C, H, W = 2, 4, 16, 16
HW = H * W                       # 256 spatial positions per image
BC = B * C                       # 8 rows of the (B*C, HW) input
HIDDEN = 32
BH = B * HIDDEN                  # 64: batch-stacked hidden rows
OUT2, OUT3, OUT4 = 1, 8, 8       # model2 / model3 / model4 output widths

PACK = 128                       # lane-dense packed output width
M_PAD = 8                        # output rows padded to a full sublane tile

# Packed-output column layout: [ xt(32) | x(1) | xt2(8) | xt3(8) | 0-pad ].
XT_OFF = 0
X_OFF = HIDDEN                   # 32
XT2_OFF = HIDDEN + OUT2          # 33
XT3_OFF = HIDDEN + OUT2 + OUT3   # 41

# Packed-parameter row layout (single (P_ROWS, 128) operand).
CONV_R = 0                       # rows [  0: 64): block-diag w1^T, bias col
B1_COL = BC                      # column 8 of the conv block holds b1^T
HEAD_R = 64                      # rows [ 64:128): head pack stacked per batch
HBIAS_R = 128                    # row  [128:129): head bias row
MASK_R = 136                     # rows [136:144): batch-select mask (cols 0:64)
P_ROWS = 144


def mymodel_kernel(x_ref, p_ref, out_ref):
    # model1 1x1 conv, both batches at once via a block-diagonal weight:
    # featT[b*32+h, p] = sum_c w1[c,h] * x[b,c,p]            (lane-dense)
    featT = jnp.dot(p_ref[CONV_R:CONV_R + BH, 0:BC], x_ref[...],
                    preferred_element_type=jnp.float32)          # (64, 256)
    featT = jnp.maximum(featT + p_ref[CONV_R:CONV_R + BH, B1_COL:B1_COL + 1],
                        0.0)                                      # bias + ReLU

    # Global average pool as a trans-B MXU dot against a constant 1/HW block:
    # pooled[i, b*32+h] = mean_p featT[b*32+h, p]   (identical for every row i)
    pool = jnp.full((M_PAD, HW), 1.0 / HW, dtype=jnp.float32)
    pooled = lax.dot_general(pool, featT,
                             dimension_numbers=(((1,), (1,)), ((), ())),
                             preferred_element_type=jnp.float32)  # (8, 64)

    # Batch-select mask (from the packed params): row b keeps only its own
    # 32-wide hidden block, rows >= B become zero.
    xt = pooled * p_ref[MASK_R:MASK_R + M_PAD, 0:BH]              # (8, 64)

    # Fused heads (+ identity passthrough of xt) in a single lane-dense dot:
    # packed cols = [ I(32) | w2 | w3 | w4 | 0-pad ], last param row = bias.
    out_ref[...] = (jnp.dot(xt, p_ref[HEAD_R:HEAD_R + BH, :],
                            preferred_element_type=jnp.float32)
                    + p_ref[HBIAS_R:HBIAS_R + 1, :])              # (8, 128)


def pack_params(params):
    """Pack all weights into a single (P_ROWS, 128) operand. Call ONCE,
    outside the per-inference path (params are static across calls)."""
    w1, b1, w2, b2, w3, b3, w4, b4 = params
    p = jnp.zeros((P_ROWS, PACK), jnp.float32)

    # Conv block: block-diagonal w1^T + bias column (per batch).
    w1T = w1.T                                    # (HIDDEN, C)
    for b in range(B):
        r0 = CONV_R + b * HIDDEN
        p = p.at[r0:r0 + HIDDEN, b * C:(b + 1) * C].set(w1T)
        p = p.at[r0:r0 + HIDDEN, B1_COL:B1_COL + 1].set(b1.T)

    # Head pack: [ I(32) | w2 | w3 | w4 | 0 ], stacked once per batch block.
    wpack = jnp.zeros((HIDDEN, PACK), jnp.float32)
    wpack = wpack.at[:, XT_OFF:XT_OFF + HIDDEN].set(jnp.eye(HIDDEN, dtype=jnp.float32))
    wpack = wpack.at[:, X_OFF:X_OFF + OUT2].set(w2)
    wpack = wpack.at[:, XT2_OFF:XT2_OFF + OUT3].set(w3)
    wpack = wpack.at[:, XT3_OFF:XT3_OFF + OUT4].set(w4)
    for b in range(B):
        r0 = HEAD_R + b * HIDDEN
        p = p.at[r0:r0 + HIDDEN, :].set(wpack)

    # Head bias row (zero in the xt-passthrough columns).
    p = p.at[HBIAS_R:HBIAS_R + 1, X_OFF:X_OFF + OUT2].set(b2)
    p = p.at[HBIAS_R:HBIAS_R + 1, XT2_OFF:XT2_OFF + OUT3].set(b3)
    p = p.at[HBIAS_R:HBIAS_R + 1, XT3_OFF:XT3_OFF + OUT4].set(b4)

    # Batch-select mask: mask[i, j] = 1 iff i < B and j // HIDDEN == i.
    row = jnp.arange(M_PAD)[:, None]
    col = jnp.arange(BH)[None, :]
    mask = ((col // HIDDEN) == row) & (row < B)
    p = p.at[MASK_R:MASK_R + M_PAD, 0:BH].set(mask.astype(jnp.float32))
    return p


@jax.jit
def mymodel_forward(x_nchw, packed_params):
    """x_nchw: [B, C, H, W] float32; packed_params: from pack_params().
    Returns (x, xt2, xt, xt3)."""
    # Free metadata reshape: NCHW row-major -> (B*C, HW); no XLA transpose.
    x2d = x_nchw.reshape(BC, HW)

    out = pl.pallas_call(
        mymodel_kernel,
        out_shape=jax.ShapeDtypeStruct((M_PAD, PACK), jnp.float32),
        in_specs=[
            pl.BlockSpec(memory_space=pltpu.MemorySpace.VMEM),
            pl.BlockSpec(memory_space=pltpu.MemorySpace.VMEM),
        ],
        out_specs=pl.BlockSpec(memory_space=pltpu.MemorySpace.VMEM),
    )(x2d, packed_params)

    xt = out[0:B, XT_OFF:XT_OFF + HIDDEN]
    x = out[0:B, X_OFF:X_OFF + OUT2]
    xt2 = out[0:B, XT2_OFF:XT2_OFF + OUT3]
    xt3 = out[0:B, XT3_OFF:XT3_OFF + OUT4]
    return x, xt2, xt, xt3


def reference_forward(x_nchw, params):
    w1, b1, w2, b2, w3, b3, w4, b4 = params
    x_bhwc = jnp.transpose(x_nchw, (0, 2, 3, 1)).reshape(B, HW, C)
    feat = jnp.maximum(jnp.einsum('bpc,ch->bph', x_bhwc, w1) + b1, 0.0)
    xt = jnp.mean(feat, axis=1)                    # (B, HIDDEN)
    x = xt @ w2 + b2
    xt2 = xt @ w3 + b3
    xt3 = xt @ w4 + b4
    return x, xt2, xt, xt3


if __name__ == "__main__":
    key = jax.random.PRNGKey(0)
    keys = jax.random.split(key, 9)

    data = jax.random.normal(keys[0], (B, C, H, W), dtype=jnp.float32)

    # Deterministic synthetic parameters (no checkpoint loading).
    w1 = jax.random.normal(keys[1], (C, HIDDEN), dtype=jnp.float32) * 0.1
    b1 = jax.random.normal(keys[2], (1, HIDDEN), dtype=jnp.float32) * 0.1
    w2 = jax.random.normal(keys[3], (HIDDEN, OUT2), dtype=jnp.float32) * 0.1
    b2 = jax.random.normal(keys[4], (1, OUT2), dtype=jnp.float32) * 0.1
    w3 = jax.random.normal(keys[5], (HIDDEN, OUT3), dtype=jnp.float32) * 0.1
    b3 = jax.random.normal(keys[6], (1, OUT3), dtype=jnp.float32) * 0.1
    w4 = jax.random.normal(keys[7], (HIDDEN, OUT4), dtype=jnp.float32) * 0.1
    b4 = jax.random.normal(keys[8], (1, OUT4), dtype=jnp.float32) * 0.1
    params = (w1, b1, w2, b2, w3, b3, w4, b4)

    # Parameter packing done ONCE, outside the per-call path.
    packed_params = jax.block_until_ready(pack_params(params))

    x_out, xt2_out, xt_out, xt3_out = mymodel_forward(data, packed_params)
    jax.block_until_ready((x_out, xt2_out, xt_out, xt3_out))

    # Sanity check against a pure-JAX reference.
    xr, xt2r, xtr, xt3r = reference_forward(data, params)
    assert jnp.allclose(x_out, xr, atol=1e-5)
    assert jnp.allclose(xt2_out, xt2r, atol=1e-5)
    assert jnp.allclose(xt_out, xtr, atol=1e-5)
    assert jnp.allclose(xt3_out, xt3r, atol=1e-5)

    print("KERNEL_OK")
</pallas_src>

<mosaic_0001>
module attributes {stable_mosaic.version = 11 : i64} {
  func.func @mymodel_kernel(%arg0: memref<8x256xf32, #tpu.memory_space<vmem>>, %arg1: memref<144x128xf32, #tpu.memory_space<vmem>>, %arg2: memref<8x128xf32, #tpu.memory_space<vmem>>) attributes {dimension_semantics = [], scalar_prefetch = 0 : i64, scratch_operands = 0 : i64, tpu.core_type = #tpu.core_type<tc>} {
    %c0 = arith.constant 0 : index
    %c0_0 = arith.constant 0 : index
    %0 = vector.load %arg1[%c0, %c0_0] : memref<144x128xf32, #tpu.memory_space<vmem>>, vector<64x8xf32>
    %c0_1 = arith.constant 0 : index
    %c0_2 = arith.constant 0 : index
    %1 = vector.load %arg0[%c0_1, %c0_2] : memref<8x256xf32, #tpu.memory_space<vmem>>, vector<8x256xf32>
    %cst = arith.constant dense<0.000000e+00> : vector<64x256xf32>
    %2 = tpu.matmul %0, %1, %cst {dimension_numbers = #tpu.dot_dimension_numbers<[1], [0], [0], [1], [0, 0, 1, 1], [], []>} : vector<64x8xf32>, vector<8x256xf32>, vector<64x256xf32> -> vector<64x256xf32>
    %c0_3 = arith.constant 0 : index
    %c8 = arith.constant 8 : index
    %3 = vector.load %arg1[%c0_3, %c8] : memref<144x128xf32, #tpu.memory_space<vmem>>, vector<64x1xf32>
    %4 = vector.broadcast %3 : vector<64x1xf32> to vector<64x256xf32>
    %5 = arith.addf %2, %4 : vector<64x256xf32>
    %cst_4 = arith.constant 0.000000e+00 : f32
    %6 = vector.broadcast %cst_4 : f32 to vector<64x256xf32>
    %7 = arith.maximumf %5, %6 : vector<64x256xf32>
    %cst_5 = arith.constant 3.906250e-03 : f32
    %8 = vector.broadcast %cst_5 : f32 to vector<8x256xf32>
    %cst_6 = arith.constant dense<0.000000e+00> : vector<8x64xf32>
    %9 = tpu.matmul %8, %7, %cst_6 {dimension_numbers = #tpu.dot_dimension_numbers<[1], [1], [0], [0], [0, 0, 1, 0], [], []>} : vector<8x256xf32>, vector<64x256xf32>, vector<8x64xf32> -> vector<8x64xf32>
    %c136 = arith.constant 136 : index
    %c0_7 = arith.constant 0 : index
    %10 = vector.load %arg1[%c136, %c0_7] : memref<144x128xf32, #tpu.memory_space<vmem>>, vector<8x64xf32>
    %11 = arith.mulf %9, %10 : vector<8x64xf32>
    %c64 = arith.constant 64 : index
    %c0_8 = arith.constant 0 : index
    %12 = vector.load %arg1[%c64, %c0_8] : memref<144x128xf32, #tpu.memory_space<vmem>>, vector<64x128xf32>
    %cst_9 = arith.constant dense<0.000000e+00> : vector<8x128xf32>
    %13 = tpu.matmul %11, %12, %cst_9 {dimension_numbers = #tpu.dot_dimension_numbers<[1], [0], [0], [1], [0, 0, 1, 1], [], []>} : vector<8x64xf32>, vector<64x128xf32>, vector<8x128xf32> -> vector<8x128xf32>
    %c128 = arith.constant 128 : index
    %c0_10 = arith.constant 0 : index
    %14 = vector.load %arg1[%c128, %c0_10] : memref<144x128xf32, #tpu.memory_space<vmem>>, vector<1x128xf32>
    %15 = vector.broadcast %14 : vector<1x128xf32> to vector<8x128xf32>
    %16 = arith.addf %13, %15 : vector<8x128xf32>
    %c0_11 = arith.constant 0 : index
    %c0_12 = arith.constant 0 : index
    %17 = vector.load %arg2[%c0_11, %c0_12] : memref<8x128xf32, #tpu.memory_space<vmem>>, vector<8x128xf32>
    tpu.vector_store %arg2[%c0_11, %c0_12], %16 {strides = array<i32>} : memref<8x128xf32, #tpu.memory_space<vmem>>, vector<8x128xf32>,
    return
  }
}

</mosaic_0001>

<llo_original>
// kernel: mymodel_forward.1
$region0: #{mymodel_forward.1}
  #allocation0 [shape = 'u32[]', space=smem, size = 0x4, offset = 0x4, fixed_abs, tag = 'smem constant byte address 0x4 - core index']
  #allocation1 [shape = 'u32[144,128]{1,0:T(1,128)}', space=vmem, size = 0x12000, scoped, tag = 'internal scratch']
  %s0 = inlined_call_operand.vmem [shape: f32[8,256], index: 0, kind: input, shape index: {}]
  %s1 = inlined_call_operand.vmem [shape: f32[144,128], index: 1, kind: input, shape index: {}]
  %s2 = inlined_call_operand.vmem [shape: f32[8,128], index: 2, kind: output, shape index: {}]
  %s3 = sld [smem:[#allocation0]]
  $region18: #{mymodel_forward.1} parent=0
    _
  %s5 = ssub.s32 1, %s3
  %s6 = scalar_select 0, %s5, %s3
  // Predicated region
  $region2: #{mymodel_forward.1} parent=0 // pred_check
    _
  $region3: #{mymodel_forward.1} parent=0 // pred_check_branch
    %8 = sbr.rel (0) target = $region5
  $region4: #{mymodel_forward.1} parent=0 // pred_region
    _
  $region5: #{mymodel_forward.1} parent=0 // pred_fallthru
    _
  // Predicated region
  $region6: #{mymodel_forward.1} parent=0 // pred_check
    _
  $region7: #{mymodel_forward.1} parent=0 // pred_check_branch
    %10 = sbr.rel (0) target = $region9
  $region8: #{mymodel_forward.1} parent=0 // pred_region
    _
  $region9: #{mymodel_forward.1} parent=0 // pred_fallthru
    _
  %v11 = vld [vmem:[%s1] sm:$0xff]
  %v12 = vld [vmem:[%s1 + $0x8] sm:$0xff]
  %v13 = vld [vmem:[%s1 + $0x10] sm:$0xff]
  %v14 = vld [vmem:[%s1 + $0x18] sm:$0xff]
  %v15 = vld [vmem:[%s1 + $0x20] sm:$0xff]
  %v16 = vld [vmem:[%s1 + $0x28] sm:$0xff]
  %v17 = vld [vmem:[%s1 + $0x30] sm:$0xff]
  %v18 = vld [vmem:[%s1 + $0x38] sm:$0xff]
  %v19 = vld [vmem:[%s0] sm:$0xff]
  %v20 = vld [vmem:[%s0 + $0x8] sm:$0xff]
  %22 = vset.pattern.permute.xlu0 8
  %23 = vperm.xlu0 %22, %v11
  %v24 = vpop.permute.xlu0 %23
  %27 = vset.pattern.permute.xlu0 8
  %28 = vperm.xlu0 %27, %v12
  %v29 = vpop.permute.xlu0 %28
  %32 = vset.pattern.permute.xlu0 8
  %33 = vperm.xlu0 %32, %v13
  %v34 = vpop.permute.xlu0 %33
  %37 = vset.pattern.permute.xlu0 8
  %38 = vperm.xlu0 %37, %v14
  %v39 = vpop.permute.xlu0 %38
  %42 = vset.pattern.permute.xlu0 8
  %43 = vperm.xlu0 %42, %v15
  %v44 = vpop.permute.xlu0 %43
  %47 = vset.pattern.permute.xlu0 8
  %48 = vperm.xlu0 %47, %v16
  %v49 = vpop.permute.xlu0 %48
  %52 = vset.pattern.permute.xlu0 8
  %53 = vperm.xlu0 %52, %v17
  %v54 = vpop.permute.xlu0 %53
  %57 = vset.pattern.permute.xlu0 8
  %58 = vperm.xlu0 %57, %v18
  %v59 = vpop.permute.xlu0 %58
  %vm61 = vcmask 64512
  %v62 = vsel %vm61, %v11, 0
  %v64 = vsel %vm61, %v12, 0
  %v66 = vsel %vm61, %v13, 0
  %v68 = vsel %vm61, %v14, 0
  %v70 = vsel %vm61, %v15, 0
  %v72 = vsel %vm61, %v16, 0
  %v74 = vsel %vm61, %v17, 0
  %v76 = vsel %vm61, %v18, 0
  %78 = vmatprep.subr.mxu0 %v20
  %79 = vmatpush1.msra.mxu0 %v19
  %80 = vmatprep.subr.mxu0 0.0
  %81 = vmatpush1.msra.mxu0 0.0
  %82 = vmatprep.subr.mxu0 0.0
  %83 = vmatpush1.msra.mxu0 0.0
  %84 = vmatprep.subr.mxu0 0.0
  %85 = vmatpush1.msra.mxu0 0.0
  %86 = vmatprep.subr.mxu0 0.0
  %87 = vmatpush1.msra.mxu0 0.0
  %88 = vmatprep.subr.mxu0 0.0
  %89 = vmatpush1.msra.mxu0 0.0
  %90 = vmatprep.subr.mxu0 0.0
  %91 = vmatpush1.msra.mxu0 0.0
  %92 = vmatprep.subr.mxu0 0.0
  %93 = vmatpush1.msra.mxu0 0.0
  %94 = vmatprep.subr.mxu0 0.0
  %95 = vmatpush1.msra.mxu0 0.0
  %96 = vmatprep.subr.mxu0 0.0
  %97 = vmatpush1.msra.mxu0 0.0
  %98 = vmatprep.subr.mxu0 0.0
  %99 = vmatpush1.msra.mxu0 0.0
  %100 = vmatprep.subr.mxu0 0.0
  %101 = vmatpush1.msra.mxu0 0.0
  %102 = vmatprep.subr.mxu0 0.0
  %103 = vmatpush1.msra.mxu0 0.0
  %104 = vmatprep.subr.mxu0 0.0
  %105 = vmatpush1.msra.mxu0 0.0
  %106 = vmatprep.subr.mxu0 0.0
  %107 = vmatpush1.msra.mxu0 0.0
  %108 = vmatprep.subr.mxu0 0.0
  %109 = vmatpush1.msra.mxu0 0.0
  %110 = vmatprep.subr.mxu0 0.0
  %111 = vmatpush1.msra.mxu0 0.0
  %112 = vmatprep.subr.mxu0 0.0
  %113 = vmatpush1.msra.mxu0 0.0
  %114 = vmatprep.subr.mxu0 0.0
  %115 = vmatpush1.msra.mxu0 0.0
  %116 = vmatprep.subr.mxu0 0.0
  %117 = vmatpush1.msra.mxu0 0.0
  %118 = vmatprep.subr.mxu0 0.0
  %119 = vmatpush1.msra.mxu0 0.0
  %120 = vmatprep.subr.mxu0 0.0
  %121 = vmatpush1.msra.mxu0 0.0
  %122 = vmatprep.subr.mxu0 0.0
  %123 = vmatpush1.msra.mxu0 0.0
  %124 = vmatprep.subr.mxu0 0.0
  %125 = vmatpush1.msra.mxu0 0.0
  %126 = vmatprep.subr.mxu0 0.0
  %127 = vmatpush1.msra.mxu0 0.0
  %128 = vmatprep.subr.mxu0 0.0
  %129 = vmatpush1.msra.mxu0 0.0
  %130 = vmatprep.subr.mxu0 0.0
  %131 = vmatpush1.msra.mxu0 0.0
  %132 = vmatprep.subr.mxu0 0.0
  %133 = vmatpush1.msra.mxu0 0.0
  %134 = vmatprep.subr.mxu0 0.0
  %135 = vmatpush1.msra.mxu0 0.0
  %136 = vmatprep.subr.mxu0 0.0
  %137 = vmatpush1.msra.mxu0 0.0
  %138 = vmatprep.subr.mxu0 0.0
  %139 = vmatpush1.msra.mxu0 0.0
  %140 = vmatprep.subr.mxu0 0.0
  %141 = vmatpush1.msra.mxu0 0.0
  %142 = vmatprep.mubr.f32.mxu0 0.0
  %143 = vmatmul.mubr.f32.gmra.mrb[0].mxu0 %v62
  %v144 = vpop.f32.mrb[0].mxu0
  %v145 = vadd.f32 %v24, %v144
  %v146 = vpop.f32.mrb[0].mxu0
  %v147 = vadd.f32 %v24, %v146
  %148 = vmatprep.mubr.f32.mxu0 0.0
  %149 = vmatmul.mubr.f32.gmra.mrb[0].mxu0 %v64
  %v150 = vpop.f32.mrb[0].mxu0
  %v151 = vadd.f32 %v29, %v150
  %v152 = vpop.f32.mrb[0].mxu0
  %v153 = vadd.f32 %v29, %v152
  %154 = vmatprep.mubr.f32.mxu0 0.0
  %155 = vmatmul.mubr.f32.gmra.mrb[0].mxu0 %v66
  %v156 = vpop.f32.mrb[0].mxu0
  %v157 = vadd.f32 %v34, %v156
  %v158 = vpop.f32.mrb[0].mxu0
  %v159 = vadd.f32 %v34, %v158
  %160 = vmatprep.mubr.f32.mxu0 0.0
  %161 = vmatmul.mubr.f32.gmra.mrb[0].mxu0 %v68
  %v162 = vpop.f32.mrb[0].mxu0
  %v163 = vadd.f32 %v39, %v162
  %v164 = vpop.f32.mrb[0].mxu0
  %v165 = vadd.f32 %v39, %v164
  %166 = vmatprep.mubr.f32.mxu0 0.0
  %167 = vmatmul.mubr.f32.gmra.mrb[0].mxu0 %v70
  %v168 = vpop.f32.mrb[0].mxu0
  %v169 = vadd.f32 %v44, %v168
  %v170 = vpop.f32.mrb[0].mxu0
  %v171 = vadd.f32 %v44, %v170
  %172 = vmatprep.mubr.f32.mxu0 0.0
  %173 = vmatmul.mubr.f32.gmra.mrb[0].mxu0 %v72
  %v174 = vpop.f32.mrb[0].mxu0
  %v175 = vadd.f32 %v49, %v174
  %v176 = vpop.f32.mrb[0].mxu0
  %v177 = vadd.f32 %v49, %v176
  %178 = vmatprep.mubr.f32.mxu0 0.0
  %179 = vmatmul.mubr.f32.gmra.mrb[0].mxu0 %v74
  %v180 = vpop.f32.mrb[0].mxu0
  %v181 = vadd.f32 %v54, %v180
  %v182 = vpop.f32.mrb[0].mxu0
  %v183 = vadd.f32 %v54, %v182
  %184 = vmatprep.mubr.f32.mxu0 0.0
  %185 = vmatmul.mubr.f32.gmra.mrb[0].mxu0 %v76
  %v186 = vpop.f32.mrb[0].mxu0
  %v187 = vadd.f32 %v59, %v186
  %v188 = vpop.f32.mrb[0].mxu0
  %v189 = vadd.f32 %v59, %v188
  %190 = vdwg.mxu0
  %v191 = vmax.f32 %v145, 0.0
  %v192 = vmax.f32 %v147, 0.0
  %v193 = vmax.f32 %v151, 0.0
  %v194 = vmax.f32 %v153, 0.0
  %v195 = vmax.f32 %v157, 0.0
  %v196 = vmax.f32 %v159, 0.0
  %v197 = vmax.f32 %v163, 0.0
  %v198 = vmax.f32 %v165, 0.0
  %v199 = vmax.f32 %v169, 0.0
  %v200 = vmax.f32 %v171, 0.0
  %v201 = vmax.f32 %v175, 0.0
  %v202 = vmax.f32 %v177, 0.0
  %v203 = vmax.f32 %v181, 0.0
  %v204 = vmax.f32 %v183, 0.0
  %v205 = vmax.f32 %v187, 0.0
  %v206 = vmax.f32 %v189, 0.0
  %207 = vmatprep.subr.mxu0 %v192
  %208 = vmatpush1.xpose.msra.mxu0 %v191
  %209 = vmatprep.subr.mxu0 %v194
  %210 = vmatpush1.xpose.msra.mxu0 %v193
  %211 = vmatprep.subr.mxu0 %v196
  %212 = vmatpush1.xpose.msra.mxu0 %v195
  %213 = vmatprep.subr.mxu0 %v198
  %214 = vmatpush1.xpose.msra.mxu0 %v197
  %215 = vmatprep.subr.mxu0 %v200
  %216 = vmatpush1.xpose.msra.mxu0 %v199
  %217 = vmatprep.subr.mxu0 %v202
  %218 = vmatpush1.xpose.msra.mxu0 %v201
  %219 = vmatprep.subr.mxu0 %v204
  %220 = vmatpush1.xpose.msra.mxu0 %v203
  %221 = vmatprep.subr.mxu0 %v206
  %222 = vmatpush1.xpose.msra.mxu0 %v205
  %223 = vmatprep.subr.mxu0 0.0
  %224 = vmatpush1.xpose.msra.mxu0 0.0
  %225 = vmatprep.subr.mxu0 0.0
  %226 = vmatpush1.xpose.msra.mxu0 0.0
  %227 = vmatprep.subr.mxu0 0.0
  %228 = vmatpush1.xpose.msra.mxu0 0.0
  %229 = vmatprep.subr.mxu0 0.0
  %230 = vmatpush1.xpose.msra.mxu0 0.0
  %231 = vmatprep.subr.mxu0 0.0
  %232 = vmatpush1.xpose.msra.mxu0 0.0
  %233 = vmatprep.subr.mxu0 0.0
  %234 = vmatpush1.xpose.msra.mxu0 0.0
  %235 = vmatprep.subr.mxu0 0.0
  %236 = vmatpush1.xpose.msra.mxu0 0.0
  %237 = vmatprep.subr.mxu0 0.0
  %238 = vmatpush1.xpose.msra.mxu0 0.0
  %239 = vmatprep.subr.mxu0 0.0
  %240 = vmatpush1.xpose.msra.mxu0 0.0
  %241 = vmatprep.subr.mxu0 0.0
  %242 = vmatpush1.xpose.msra.mxu0 0.0
  %243 = vmatprep.subr.mxu0 0.0
  %244 = vmatpush1.xpose.msra.mxu0 0.0
  %245 = vmatprep.subr.mxu0 0.0
  %246 = vmatpush1.xpose.msra.mxu0 0.0
  %247 = vmatprep.subr.mxu0 0.0
  %248 = vmatpush1.xpose.msra.mxu0 0.0
  %249 = vmatprep.subr.mxu0 0.0
  %250 = vmatpush1.xpose.msra.mxu0 0.0
  %251 = vmatprep.subr.mxu0 0.0
  %252 = vmatpush1.xpose.msra.mxu0 0.0
  %253 = vmatprep.subr.mxu0 0.0
  %254 = vmatpush1.xpose.msra.mxu0 0.0
  %255 = vmatprep.subr.mxu0 0.0
  %256 = vmatpush1.xpose.msra.mxu0 0.0
  %257 = vmatprep.subr.mxu0 0.0
  %258 = vmatpush1.xpose.msra.mxu0 0.0
  %259 = vmatprep.subr.mxu0 0.0
  %260 = vmatpush1.xpose.msra.mxu0 0.0
  %261 = vmatprep.subr.mxu0 0.0
  %262 = vmatpush1.xpose.msra.mxu0 0.0
  %263 = vmatprep.subr.mxu0 0.0
  %264 = vmatpush1.xpose.msra.mxu0 0.0
  %265 = vmatprep.subr.mxu0 0.0
  %266 = vmatpush1.xpose.msra.mxu0 0.0
  %267 = vmatprep.subr.mxu0 0.0
  %268 = vmatpush1.xpose.msra.mxu0 0.0
  %269 = vmatprep.subr.mxu0 0.0
  %270 = vmatpush1.xpose.msra.mxu0 0.0
  %271 = vmatprep.mubr.f32.mxu0 0.00390625
  %272 = vmatmul.mubr.f32.gmra.mrb[0].mxu0 0.00390625
  %v273 = vpop.f32.mrb[0].mxu0
  %v274 = vadd.f32 0.0, %v273
  %v275 = vpop.f32.mrb[0].mxu0
  %276 = vdwg.mxu0
  %v277 = vld [vmem:[%s1 + $0x88] sm:$0xff]
  %v278 = vmul.f32 %v274, %v277
  %v279 = vld [vmem:[%s1 + $0x40] sm:$0xff]
  %v280 = vld [vmem:[%s1 + $0x48] sm:$0xff]
  %v281 = vld [vmem:[%s1 + $0x50] sm:$0xff]
  %v282 = vld [vmem:[%s1 + $0x58] sm:$0xff]
  %v283 = vld [vmem:[%s1 + $0x60] sm:$0xff]
  %v284 = vld [vmem:[%s1 + $0x68] sm:$0xff]
  %v285 = vld [vmem:[%s1 + $0x70] sm:$0xff]
  %v286 = vld [vmem:[%s1 + $0x78] sm:$0xff]
  %v287 = vld [vmem:[%s1 + $0x80] sm:$0x1]
  %v288 = vlaneseq
  %v289 = vshrl.u32 %v288, 7
  %v290 = vsub.s32 0, %v289
  %v291 = vrot.slane %v287, %v290
  %vm292 = vcmask 523264
  %v294 = vsel %vm292, %v278, 0
  %296 = vmatprep.subr.mxu0 0.0
  %297 = vmatpush1.msra.mxu0 %v279
  %298 = vmatprep.subr.mxu0 0.0
  %299 = vmatpush1.msra.mxu0 %v280
  %300 = vmatprep.subr.mxu0 0.0
  %301 = vmatpush1.msra.mxu0 %v281
  %302 = vmatprep.subr.mxu0 0.0
  %303 = vmatpush1.msra.mxu0 %v282
  %304 = vmatprep.subr.mxu0 0.0
  %305 = vmatpush1.msra.mxu0 %v283
  %306 = vmatprep.subr.mxu0 0.0
  %307 = vmatpush1.msra.mxu0 %v284
  %308 = vmatprep.subr.mxu0 0.0
  %309 = vmatpush1.msra.mxu0 %v285
  %310 = vmatprep.subr.mxu0 0.0
  %311 = vmatpush1.msra.mxu0 %v286
  %312 = vmatprep.subr.mxu0 0.0
  %313 = vmatpush1.msra.mxu0 0.0
  %314 = vmatprep.subr.mxu0 0.0
  %315 = vmatpush1.msra.mxu0 0.0
  %316 = vmatprep.subr.mxu0 0.0
  %317 = vmatpush1.msra.mxu0 0.0
  %318 = vmatprep.subr.mxu0 0.0
  %319 = vmatpush1.msra.mxu0 0.0
  %320 = vmatprep.subr.mxu0 0.0
  %321 = vmatpush1.msra.mxu0 0.0
  %322 = vmatprep.subr.mxu0 0.0
  %323 = vmatpush1.msra.mxu0 0.0
  %324 = vmatprep.subr.mxu0 0.0
  %325 = vmatpush1.msra.mxu0 0.0
  %326 = vmatprep.subr.mxu0 0.0
  %327 = vmatpush1.msra.mxu0 0.0
  %328 = vmatprep.subr.mxu0 0.0
  %329 = vmatpush1.msra.mxu0 0.0
  %330 = vmatprep.subr.mxu0 0.0
  %331 = vmatpush1.msra.mxu0 0.0
  %332 = vmatprep.subr.mxu0 0.0
  %333 = vmatpush1.msra.mxu0 0.0
  %334 = vmatprep.subr.mxu0 0.0
  %335 = vmatpush1.msra.mxu0 0.0
  %336 = vmatprep.subr.mxu0 0.0
  %337 = vmatpush1.msra.mxu0 0.0
  %338 = vmatprep.subr.mxu0 0.0
  %339 = vmatpush1.msra.mxu0 0.0
  %340 = vmatprep.subr.mxu0 0.0
  %341 = vmatpush1.msra.mxu0 0.0
  %342 = vmatprep.subr.mxu0 0.0
  %343 = vmatpush1.msra.mxu0 0.0
  %344 = vmatprep.subr.mxu0 0.0
  %345 = vmatpush1.msra.mxu0 0.0
  %346 = vmatprep.subr.mxu0 0.0
  %347 = vmatpush1.msra.mxu0 0.0
  %348 = vmatprep.subr.mxu0 0.0
  %349 = vmatpush1.msra.mxu0 0.0
  %350 = vmatprep.subr.mxu0 0.0
  %351 = vmatpush1.msra.mxu0 0.0
  %352 = vmatprep.subr.mxu0 0.0
  %353 = vmatpush1.msra.mxu0 0.0
  %354 = vmatprep.subr.mxu0 0.0
  %355 = vmatpush1.msra.mxu0 0.0
  %356 = vmatprep.subr.mxu0 0.0
  %357 = vmatpush1.msra.mxu0 0.0
  %358 = vmatprep.subr.mxu0 0.0
  %359 = vmatpush1.msra.mxu0 0.0
  %360 = vmatprep.mubr.f32.mxu0 0.0
  %361 = vmatmul.mubr.f32.gmra.mrb[0].mxu0 %v294
  %v362 = vpop.f32.mrb[0].mxu0
  %v363 = vadd.f32 %v291, %v362
  %v364 = vpop.f32.mrb[0].mxu0
  %365 = vdwg.mxu0
  %366 = vst [vmem:[%s2] sm:$0xff] %v363
  // Predicated region
  $region10: #{mymodel_forward.1} parent=0 // pred_check
    _
  $region11: #{mymodel_forward.1} parent=0 // pred_check_branch
    %368 = sbr.rel (0) target = $region13
  $region12: #{mymodel_forward.1} parent=0 // pred_region
    _
  $region13: #{mymodel_forward.1} parent=0 // pred_fallthru
    _
  // Predicated region
  $region14: #{mymodel_forward.1} parent=0 // pred_check
    _
  $region15: #{mymodel_forward.1} parent=0 // pred_check_branch
    %370 = sbr.rel (0) target = $region17
  $region16: #{mymodel_forward.1} parent=0 // pred_region
    _
  $region17: #{mymodel_forward.1} parent=0 // pred_fallthru
    _

</llo_original>
